<compile_context>
chip_gen: v5e
topology: v5e:2x2
jax: 0.10.0
libtpu: 0.0.40
codegen_flags: <defaults>
</compile_context>

<pallas_src>
import functools

import jax
import jax.numpy as jnp
from jax import lax
from jax.experimental import pallas as pl
from jax.experimental.pallas import tpu as pltpu

_LANES = 128
_ACC_SUBLANES = 8       # accumulator block is one (8, 128) f32 vreg
_SENTINEL = -1e4        # finite (f16-safe); BCE(sentinel, 0) == 0 exactly


def _round_up(x, m):
    return (x + m - 1) // m * m


def _detect_num_tensorcores():
    """Best-effort TensorCore count for one pallas_call (1 on v5e/v6e)."""
    for probe in (lambda: pltpu.get_tpu_info(), lambda: jax.devices()[0]):
        try:
            obj = probe()
        except Exception:
            continue
        for name in ("num_cores", "core_count", "num_tensorcores"):
            v = getattr(obj, name, None)
            try:
                v = int(v)
            except (TypeError, ValueError):
                continue
            if v > 0:
                return min(v, 2)
    return 1


def _bce_sum_kernel(x_ref, t_ref, out_ref, *, tile, steps, rows, blocks_full,
                    need_mask):
    c = pl.program_id(0)   # split / core axis ("parallel")
    i = pl.program_id(1)   # streaming reduction axis ("arbitrary")

    @pl.when(i == 0)
    def _():
        out_ref[...] = jnp.zeros_like(out_ref)

    def accumulate(masked):
        x = x_ref[...].astype(jnp.float32)
        t = t_ref[...].astype(jnp.float32)
        # Numerically-stable BCE with logits (matches
        # torch.nn.functional.binary_cross_entropy_with_logits):
        #   bce = max(x, 0) - x*t + log(1 + exp(-|x|))
        bce = jnp.maximum(x, 0.0) - x * t + jnp.log1p(jnp.exp(-jnp.abs(x)))
        if masked:
            # Row-only bound check (no element-index arithmetic -> no int32
            # overflow for huge tensors). Only partial/phantom blocks pay.
            blk = c * steps + i
            row0 = blk * tile
            r = lax.broadcasted_iota(jnp.int32, (tile, _LANES), 0)
            bce = jnp.where(row0 + r < rows, bce, 0.0)
        # VPU-only fold of the row tile down to one (8, 128) vreg partial; the
        # single cross-lane reduce happens once in the wrapper epilogue.
        out_ref[...] += jnp.sum(
            bce.reshape(tile // _ACC_SUBLANES, _ACC_SUBLANES, _LANES), axis=0)

    if need_mask:
        blk = c * steps + i

        @pl.when(blk < blocks_full)
        def _():
            accumulate(False)

        @pl.when(blk >= blocks_full)
        def _():
            accumulate(True)
    else:
        accumulate(False)


def focal_loss(inputs, targets, alpha=1.0, gamma=2.0, *,
               row_tile=8192, num_splits=None):
    """inputs: logits (any shape); targets: same shape (any numeric dtype).
    Returns a scalar float32 loss (BCE-with-logits mean + focal modulation,
    matching the PyTorch module)."""
    total = int(inputs.size)

    # PyTorch does targets.float(); the kernel upcasts per-tile anyway, so
    # stream integer / bool labels as bf16 (lossless for 0/1) to cut HBM bytes.
    if not jnp.issubdtype(targets.dtype, jnp.floating):
        targets = targets.astype(jnp.bfloat16)

    if num_splits is None:
        num_splits = _detect_num_tensorcores()
    num_splits = max(1, int(num_splits))

    # Lay the flattened problem out lane-dense as (rows, 128).
    if total % _LANES == 0:
        rows = total // _LANES
        x2 = jnp.reshape(inputs, (rows, _LANES))      # free reshape, no copy
        t2 = jnp.reshape(targets, (rows, _LANES))
    else:
        # Uncommon sub-128 tail: one sentinel pad so pad elements contribute
        # exactly 0 to the BCE sum (no per-element mask in the hot loop).
        rows = int(pl.cdiv(total, _LANES))
        pad = rows * _LANES - total
        x2 = jnp.pad(jnp.reshape(inputs, (-1,)), (0, pad),
                     constant_values=_SENTINEL).reshape(rows, _LANES)
        t2 = jnp.pad(jnp.reshape(targets, (-1,)),
                     (0, pad)).reshape(rows, _LANES)

    # Tile rows: dtype-aware sublane multiple (8 for 4B, 16 for 2B, 32 for 1B).
    sub_min = max(_ACC_SUBLANES,
                  32 // x2.dtype.itemsize, 32 // t2.dtype.itemsize)
    tile = min(_round_up(int(row_tile), sub_min),
               _round_up(int(pl.cdiv(rows, num_splits)), sub_min))
    tile = max(tile, sub_min)

    blocks_total = int(pl.cdiv(rows, tile))
    num_splits = max(1, min(num_splits, blocks_total))
    steps = int(pl.cdiv(blocks_total, num_splits))
    blocks_full = rows // tile                         # blocks with no ragged rows
    need_mask = (num_splits * steps) != blocks_full    # any partial/phantom block?

    last_block = blocks_total - 1

    def in_index(c, i):
        # Clamp phantom trailing blocks (fully masked in-kernel) in bounds.
        return (jnp.minimum(c * steps + i, last_block), 0)

    kernel = functools.partial(
        _bce_sum_kernel, tile=tile, steps=steps, rows=rows,
        blocks_full=blocks_full, need_mask=need_mask)

    bytes_io = (x2.size * x2.dtype.itemsize + t2.size * t2.dtype.itemsize
                + num_splits * _ACC_SUBLANES * _LANES * 4)
    block_bytes = tile * _LANES * (x2.dtype.itemsize + t2.dtype.itemsize)
    # Double-buffered input blocks + slack; stays under v7x's 64 MiB physical.
    vmem_limit = int(min(max(2 * block_bytes + (4 << 20), 16 << 20), 48 << 20))

    partial_sums = pl.pallas_call(
        kernel,
        out_shape=jax.ShapeDtypeStruct(
            (num_splits * _ACC_SUBLANES, _LANES), jnp.float32),
        grid_spec=pltpu.PrefetchScalarGridSpec(
            num_scalar_prefetch=0,
            grid=(num_splits, steps),
            in_specs=[
                pl.BlockSpec((tile, _LANES), in_index),
                pl.BlockSpec((tile, _LANES), in_index),
            ],
            out_specs=pl.BlockSpec((_ACC_SUBLANES, _LANES),
                                   lambda c, i: (c, 0)),
        ),
        compiler_params=pltpu.CompilerParams(
            # TODO(synk): on v7x, verify in a trace that the size-num_splits
            # "parallel" axis lands on both TensorCores; if not, switch it to
            # pltpu.CORE_PARALLEL.
            dimension_semantics=("parallel", "arbitrary"),
            vmem_limit_bytes=vmem_limit,
        ),
        cost_estimate=pl.CostEstimate(
            flops=10 * rows * _LANES,
            transcendentals=2 * rows * _LANES,
            bytes_accessed=bytes_io,
        ),
    )(x2, t2)

    # Tiny epilogue: one small cross-lane reduce + scalar focal transform.
    mean_bce = jnp.sum(partial_sums) / jnp.float32(total)
    return (jnp.float32(alpha)
            * (1.0 - jnp.exp(-mean_bce)) ** jnp.float32(gamma) * mean_bce)


def focal_loss_ref(inputs, targets, alpha=1.0, gamma=2.0):
    x = inputs.astype(jnp.float32)
    t = targets.astype(jnp.float32)
    bce = jnp.mean(jnp.maximum(x, 0.0) - x * t + jnp.log1p(jnp.exp(-jnp.abs(x))))
    return alpha * (1.0 - jnp.exp(-bce)) ** gamma * bce


if __name__ == "__main__":
    key = jax.random.PRNGKey(0)
    k1, k2 = jax.random.split(key)
    N, C, H, W = 2, 4, 16, 16
    logits = jax.random.normal(k1, (N, C, H, W), dtype=jnp.float32)
    targets = (jax.random.uniform(k2, (N, C, H, W)) > 0.5).astype(jnp.float32)

    out = focal_loss(logits, targets, alpha=1.0, gamma=2.0)
    out = jax.block_until_ready(out)

    ref = focal_loss_ref(logits, targets, alpha=1.0, gamma=2.0)
    assert jnp.allclose(out, ref, rtol=1e-5, atol=1e-5), (out, ref)
    print("KERNEL_OK")
</pallas_src>

<mosaic_0001>
module attributes {stable_mosaic.version = 11 : i64} {
  func.func @_bce_sum_kernel(%arg0: i32, %arg1: i32, %arg2: memref<16x128xf32, #tpu.memory_space<vmem>>, %arg3: memref<16x128xf32, #tpu.memory_space<vmem>>, %arg4: memref<8x128xf32, #tpu.memory_space<vmem>>) attributes {dimension_semantics = [#tpu.dimension_semantics<parallel>, #tpu.dimension_semantics<arbitrary>], iteration_bounds = array<i64: 1, 1>, scalar_prefetch = 0 : i64, scratch_operands = 0 : i64, tpu.core_type = #tpu.core_type<tc>, window_params = [{transform_indices = @transform_0, window_bounds = array<i64: 16, 128>}, {transform_indices = @transform_1, window_bounds = array<i64: 16, 128>}, {transform_indices = @transform_2, window_bounds = array<i64: 8, 128>}]} {
    %c0_i32 = arith.constant 0 : i32
    %0 = arith.cmpi eq, %arg1, %c0_i32 : i32
    %1 = arith.extui %0 : i1 to i32
    %c0_i32_0 = arith.constant 0 : i32
    %2 = arith.cmpi ne, %1, %c0_i32_0 : i32
    scf.if %2 {
      %cst_10 = arith.constant 0.000000e+00 : f32
      %20 = vector.broadcast %cst_10 : f32 to vector<8x128xf32>
      %c0_11 = arith.constant 0 : index
      %c0_12 = arith.constant 0 : index
      %21 = vector.load %arg4[%c0_11, %c0_12] : memref<8x128xf32, #tpu.memory_space<vmem>>, vector<8x128xf32>
      tpu.vector_store %arg4[%c0_11, %c0_12], %20 {strides = array<i32>} : memref<8x128xf32, #tpu.memory_space<vmem>>, vector<8x128xf32>,
    } else {
    }
    %c0 = arith.constant 0 : index
    %c0_1 = arith.constant 0 : index
    %3 = vector.load %arg2[%c0, %c0_1] : memref<16x128xf32, #tpu.memory_space<vmem>>, vector<16x128xf32>
    %c0_2 = arith.constant 0 : index
    %c0_3 = arith.constant 0 : index
    %4 = vector.load %arg3[%c0_2, %c0_3] : memref<16x128xf32, #tpu.memory_space<vmem>>, vector<16x128xf32>
    %cst = arith.constant 0.000000e+00 : f32
    %5 = vector.broadcast %cst : f32 to vector<16x128xf32>
    %6 = arith.maximumf %3, %5 : vector<16x128xf32>
    %7 = arith.mulf %3, %4 : vector<16x128xf32>
    %8 = arith.subf %6, %7 : vector<16x128xf32>
    %9 = math.absf %3 : vector<16x128xf32>
    %cst_4 = arith.constant 0.000000e+00 : f32
    %10 = vector.broadcast %cst_4 : f32 to vector<16x128xf32>
    %11 = arith.subf %10, %9 : vector<16x128xf32>
    %12 = math.exp %11 : vector<16x128xf32>
    %13 = math.log1p %12 : vector<16x128xf32>
    %14 = arith.addf %8, %13 : vector<16x128xf32>
    %c0_5 = arith.constant 0 : index
    %c0_6 = arith.constant 0 : index
    %15 = vector.load %arg4[%c0_5, %c0_6] : memref<8x128xf32, #tpu.memory_space<vmem>>, vector<8x128xf32>
    %16 = vector.shape_cast %14 : vector<16x128xf32> to vector<2x8x128xf32>
    %cst_7 = arith.constant dense<0.000000e+00> : vector<8x128xf32>
    %17 = vector.multi_reduction <add>, %16, %cst_7 [0] : vector<2x8x128xf32> to vector<8x128xf32>
    %18 = arith.addf %15, %17 : vector<8x128xf32>
    %c0_8 = arith.constant 0 : index
    %c0_9 = arith.constant 0 : index
    %19 = vector.load %arg4[%c0_8, %c0_9] : memref<8x128xf32, #tpu.memory_space<vmem>>, vector<8x128xf32>
    tpu.vector_store %arg4[%c0_8, %c0_9], %18 {strides = array<i32>} : memref<8x128xf32, #tpu.memory_space<vmem>>, vector<8x128xf32>,
    return
  }
  func.func @transform_0(%arg0: i32, %arg1: i32) -> (i32, i32) {
    %c1_i32 = arith.constant 1 : i32
    %0 = arith.muli %arg0, %c1_i32 : i32
    %1 = arith.addi %0, %arg1 : i32
    %c0_i32 = arith.constant 0 : i32
    %2 = arith.minsi %1, %c0_i32 : i32
    %c0_i32_0 = arith.constant 0 : i32
    %c0_i32_1 = arith.constant 0 : i32
    return %2, %c0_i32_0 : i32, i32
  }
  func.func @transform_1(%arg0: i32, %arg1: i32) -> (i32, i32) {
    %c1_i32 = arith.constant 1 : i32
    %0 = arith.muli %arg0, %c1_i32 : i32
    %1 = arith.addi %0, %arg1 : i32
    %c0_i32 = arith.constant 0 : i32
    %2 = arith.minsi %1, %c0_i32 : i32
    %c0_i32_0 = arith.constant 0 : i32
    %c0_i32_1 = arith.constant 0 : i32
    return %2, %c0_i32_0 : i32, i32
  }
  func.func @transform_2(%arg0: i32, %arg1: i32) -> (i32, i32) {
    %c0_i32 = arith.constant 0 : i32
    %c0_i32_0 = arith.constant 0 : i32
    return %arg0, %c0_i32 : i32, i32
  }
}

</mosaic_0001>

<llo_original>
// kernel: tpu_custom_call.1
$region0: #{tpu_custom_call.1}
  #allocation0 [shape = 'u32[]', space=smem, size = 0x4, offset = 0x4, fixed_abs, tag = 'smem constant byte address 0x4 - core index']
  #allocation1 [shape = 'u32[72,128]{1,0:T(1,128)}', space=vmem, size = 0x9000, scoped, tag = 'internal scratch']
  %s0 = inlined_call_operand.hbm [shape: f32[16,128], index: 0, kind: input, shape index: {}]
  %s1 = inlined_call_operand.hbm [shape: f32[16,128], index: 1, kind: input, shape index: {}]
  %s2 = inlined_call_operand.hbm [shape: f32[8,128], index: 2, kind: output, shape index: {}]
  %s3 = sld [smem:[#allocation0]]
  $region30: #{tpu_custom_call.1} parent=0
    _
  %s5 = ssub.s32 1, %s3
  %s6 = scalar_select 0, %s5, %s3
  $region1: #{tpu_custom_call.1} parent=0
    #allocation2 [shape = 'u8[8192]{0}', space=vmem, size = 0x2000, scoped, tag = 'input window, operand 0, single buffered']
    #allocation3 [shape = 's32[1]{0}', space=sflag, size = 0x4, scoped, tag = 'scoped memory for tpu_custom_call.1']
    #allocation4 [shape = 's32[1]{0}', space=sflag, size = 0x4, scoped, tag = 'scoped memory for tpu_custom_call.1']
    #allocation5 [shape = 'u8[8192]{0}', space=vmem, size = 0x2000, scoped, tag = 'input window, operand 1, single buffered']
    #allocation6 [shape = 's32[1]{0}', space=sflag, size = 0x4, scoped, tag = 'scoped memory for tpu_custom_call.1']
    #allocation7 [shape = 'u8[4096]{0}', space=vmem, size = 0x1000, scoped, tag = 'output window, operand 0, single buffered']
    %7 = vsyncpa [#allocation3], 0
    %8 = vsyncpa [#allocation6], 0
    %9 = vsyncpa [#allocation4], 0
    // Predicated region
    $region2: #{tpu_custom_call.1} parent=1 // pred_check
      _
    $region3: #{tpu_custom_call.1} parent=1 // pred_check_branch
      %11 = sbr.rel (0) target = $region5
    $region4: #{tpu_custom_call.1} parent=1 // pred_region
      %s12 = sadd.s32 0, 0
      %p13 = scmp.lt.s32.totalorder %s12, 0
      %s14 = scalar_select %p13, %s12, 0
      %s15 = smul.u32 2, %s14
      %17 = vsyncadd [#allocation3], 0
      %s18 = smul.addr %s15, 8
      %s19 = scalar_lea.hbm %s0, %s18
      %s20 = sshll.u32 %s19, 4
      %s21 = int_to_ptr.hbm [resolvable:$true] %s20
      %s22 = sshll.u32 [#allocation2], 4
      %s23 = int_to_ptr.vmem [resolvable:$true] %s22
      %28 = dma.hbm_to_vmem [thread:$0]  %s21, 256, %s23, [#allocation3], 128, 128, 8
    $region5: #{tpu_custom_call.1} parent=1 // pred_fallthru
      _
    // Predicated region
    $region6: #{tpu_custom_call.1} parent=1 // pred_check
      _
    $region7: #{tpu_custom_call.1} parent=1 // pred_check_branch
      %30 = sbr.rel (0) target = $region9
    $region8: #{tpu_custom_call.1} parent=1 // pred_region
      %s31 = sadd.s32 0, 0
      %p32 = scmp.lt.s32.totalorder %s31, 0
      %s33 = scalar_select %p32, %s31, 0
      %s34 = smul.u32 2, %s33
      %36 = vsyncadd [#allocation6], 0
      %s37 = smul.addr %s34, 8
      %s38 = scalar_lea.hbm %s1, %s37
      %s39 = sshll.u32 %s38, 4
      %s40 = int_to_ptr.hbm [resolvable:$true] %s39
      %s41 = sshll.u32 [#allocation5], 4
      %s42 = int_to_ptr.vmem [resolvable:$true] %s41
      %47 = dma.hbm_to_vmem [thread:$0]  %s40, 256, %s42, [#allocation6], 128, 128, 8
    $region9: #{tpu_custom_call.1} parent=1 // pred_fallthru
      _
    // Predicated region
    $region10: #{tpu_custom_call.1} parent=1 // pred_check
      _
    $region11: #{tpu_custom_call.1} parent=1 // pred_check_branch
      %49 = sbr.rel (0) target = $region13
    $region12: #{tpu_custom_call.1} parent=1 // pred_region
      %51 = dma.done [#allocation3], 256
    $region13: #{tpu_custom_call.1} parent=1 // pred_fallthru
      _
    // Predicated region
    $region14: #{tpu_custom_call.1} parent=1 // pred_check
      _
    $region15: #{tpu_custom_call.1} parent=1 // pred_check_branch
      %53 = sbr.rel (0) target = $region17
    $region16: #{tpu_custom_call.1} parent=1 // pred_region
      %55 = dma.done [#allocation6], 256
    $region17: #{tpu_custom_call.1} parent=1 // pred_fallthru
      _
    %s56 = sadd.s32 0, 0
    %p57 = scmp.lt.s32.totalorder %s56, 0
    %s58 = scalar_select %p57, %s56, 0
    %s59 = smul.u32 2, %s58
    %s60 = sadd.s32 0, 0
    %p61 = scmp.lt.s32.totalorder %s60, 0
    %s62 = scalar_select %p61, %s60, 0
    %s63 = smul.u32 2, %s62
    %p64 = scmp.eq.s32.totalorder 0, 0
    // Predicated region
    $region18: #{tpu_custom_call.1} parent=1 // pred_check
      %p65 = pneg %p64
    $region19: #{tpu_custom_call.1} parent=1 // pred_check_branch
      %67 = sbr.rel (%p65) target = $region21
    $region20: #{tpu_custom_call.1} parent=1 // pred_region
      %68 = vst [vmem:[#allocation7] sm:$0xff] 0.0
    $region21: #{tpu_custom_call.1} parent=1 // pred_fallthru
      _
    %v69 = vld [vmem:[#allocation2] sm:$0xff]
    %v70 = vld [vmem:[#allocation2 + $0x8] sm:$0xff]
    %v71 = vld [vmem:[#allocation5] sm:$0xff]
    %v72 = vld [vmem:[#allocation5 + $0x8] sm:$0xff]
    %v73 = vmax.f32 %v69, 0.0
    %v74 = vmax.f32 %v70, 0.0
    %v75 = vmul.f32 %v69, %v71
    %v76 = vmul.f32 %v70, %v72
    %v77 = vsub.f32 %v73, %v75
    %v78 = vsub.f32 %v74, %v76
    %v79 = vand.u32 2147483647, %v69
    %v80 = vand.u32 2147483647, %v70
    %v81 = vsub.f32 0.0, %v79
    %v82 = vsub.f32 0.0, %v80
    %v83 = vmul.f32 %v81, 1.442695
    %v84 = vpow.pop %v83
    %v85 = vmul.f32 %v82, 1.442695
    %v86 = vpow.pop %v85
    %v87 = vadd.f32 %v84, 1.0
    %v88 = vlog2.pop %v87
    %v89 = vmul.f32 %v88, 0.6931472
    %v90 = vmul.f32 -0.5, %v84
    %v91 = vadd.f32 %v90, 1.0
    %v92 = vmul.f32 %v91, %v84
    %v93 = vand.u32 2147483647, %v84
    %vm94 = vcmp.lt.f32.partialorder %v93, 0.0004427343
    %v95 = vsel %vm94, %v92, %v89
    %v96 = vadd.f32 %v86, 1.0
    %v97 = vlog2.pop %v96
    %v98 = vmul.f32 %v97, 0.6931472
    %v99 = vmul.f32 -0.5, %v86
    %v100 = vadd.f32 %v99, 1.0
    %v101 = vmul.f32 %v100, %v86
    %v102 = vand.u32 2147483647, %v86
    %vm103 = vcmp.lt.f32.partialorder %v102, 0.0004427343
    %v104 = vsel %vm103, %v101, %v98
    %v105 = vadd.f32 %v77, %v95
    %v106 = vadd.f32 %v78, %v104
    %v107 = vld [vmem:[#allocation7] sm:$0xff]
    %v108 = vadd.f32 %v105, %v106
    %v109 = vadd.f32 %v107, %v108
    %110 = vst [vmem:[#allocation7] sm:$0xff] %v109
    // Predicated region
    $region22: #{tpu_custom_call.1} parent=1 // pred_check
      _
    $region23: #{tpu_custom_call.1} parent=1 // pred_check_branch
      %112 = sbr.rel (0) target = $region25
    $region24: #{tpu_custom_call.1} parent=1 // pred_region
      %114 = vsyncadd [#allocation4], 0
      %s116 = sshll.u32 [#allocation7], 4
      %s117 = int_to_ptr.vmem [resolvable:$true] %s116
      %s118 = sshll.u32 %s2, 4
      %s119 = int_to_ptr.hbm [resolvable:$true] %s118
      %121 = dma.vmem_to_hbm [thread:$0]  %s117, 128, %s119, [#allocation4]
    $region25: #{tpu_custom_call.1} parent=1 // pred_fallthru
      _
    // Predicated region
    $region26: #{tpu_custom_call.1} parent=1 // pred_check
      _
    $region27: #{tpu_custom_call.1} parent=1 // pred_check_branch
      %123 = sbr.rel (0) target = $region29
    $region28: #{tpu_custom_call.1} parent=1 // pred_region
      %125 = dma.done [#allocation4], 128
    $region29: #{tpu_custom_call.1} parent=1 // pred_fallthru
      _
    %126 = vsyncpa [#allocation3], 1
    %127 = vsyncpa [#allocation6], 1
    %128 = vsyncpa [#allocation4], 1

</llo_original>
